<compile_context>
chip_gen: v6e
topology: v6e:2x2x1
jax: 0.10.0
libtpu: 0.0.40
codegen_flags: <defaults>
</compile_context>

<pallas_src>
import functools

import jax
import jax.numpy as jnp
from jax import lax
from jax.experimental import pallas as pl
from jax.experimental.pallas import tpu as pltpu


_ROW_ALIGN = 16  # bf16 sublane packing: keep per-feature table offsets 16-row aligned


def _round_up(x, m):
    return (x + m - 1) // m * m


def _table_layout(cardinalities):
    """Static per-feature row layout inside the concatenated embedding table."""
    padded = tuple(_round_up(int(c), _ROW_ALIGN) for c in cardinalities)
    offsets = []
    off = 0
    for p in padded:
        offsets.append(off)
        off += p
    return tuple(offsets), tuple(padded), off  # offsets, padded cards, total rows


def _tokenizer_kernel(idx_ref, tab_ref, bias_ref, out_ref, *, feat_specs):
    # idx_ref  : (n_features, batch_tile)            int32
    # tab_ref  : (total_rows, d_token)               bfloat16 (concat of all tables)
    # bias_ref : (1, n_features * d_token)           float32
    # out_ref  : (batch_tile, n_features * d_token)  float32
    batch_tile = idx_ref.shape[1]
    toks = []
    for f, (card, card_pad, off) in enumerate(feat_specs):
        # Clamp out-of-range indices (torch.nn.Embedding would raise; we clamp).
        idx = jnp.clip(idx_ref[f, :], 0, card - 1)                     # (batch_tile,)
        cols = lax.broadcasted_iota(jnp.int32, (batch_tile, card_pad), 1)
        onehot = (idx[:, None] == cols).astype(jnp.bfloat16)           # (batch_tile, card_pad)
        # Gather-as-matmul on the MXU; static 16-aligned slice of the resident table.
        tok = jnp.dot(onehot, tab_ref[off:off + card_pad, :],
                      preferred_element_type=jnp.float32)              # (batch_tile, d_token)
        toks.append(tok)
    # Single lane-dense store of the final layout + f32 bias add.
    out_ref[...] = jnp.concatenate(toks, axis=-1) + bias_ref[...]


def categorical_feature_tokenizer(idx_fb, table_concat, biases, cardinalities):
    """idx_fb:       (n_features, batch)        int
       table_concat: (total_rows, d_token)      bfloat16 (16-row aligned per feature)
       biases:       (n_features, d_token)      float32
       cardinalities: static tuple of per-feature cardinalities
       returns:      (batch, n_features, d_token) float32
    """
    n_features, batch = idx_fb.shape
    d_token = table_concat.shape[1]
    offsets, cards_pad, total_rows = _table_layout(cardinalities)
    assert table_concat.shape[0] == total_rows
    feat_specs = tuple(zip((int(c) for c in cardinalities), cards_pad, offsets))
    fd = n_features * d_token

    # Batch tiling: multiple of 8 (sublane) for small batches, 128-row tiles otherwise.
    if batch >= 128:
        batch_tile = 128
    else:
        batch_tile = _round_up(batch, 8)
    padded_batch = _round_up(batch, batch_tile)
    num_tiles = padded_batch // batch_tile

    idx_in = idx_fb.astype(jnp.int32)
    if padded_batch != batch:
        idx_in = jnp.pad(idx_in, ((0, 0), (0, padded_batch - batch)))  # index 0 is always valid
    bias_flat = biases.astype(jnp.float32).reshape(1, fd)

    kernel = functools.partial(_tokenizer_kernel, feat_specs=feat_specs)

    out = pl.pallas_call(
        kernel,
        out_shape=jax.ShapeDtypeStruct((padded_batch, fd), jnp.float32),
        grid_spec=pltpu.PrefetchScalarGridSpec(
            num_scalar_prefetch=0,
            grid=(num_tiles,),
            in_specs=[
                # indices: one batch tile per step
                pl.BlockSpec((n_features, batch_tile), lambda b: (0, b)),
                # concatenated table: block index constant -> DMA'd once, VMEM-resident
                pl.BlockSpec((total_rows, d_token), lambda b: (0, 0)),
                # flattened biases: constant block, VMEM-resident
                pl.BlockSpec((1, fd), lambda b: (0, 0)),
            ],
            out_specs=pl.BlockSpec((batch_tile, fd), lambda b: (b, 0)),
        ),
        compiler_params=pltpu.CompilerParams(
            dimension_semantics=("parallel",),
        ),
    )(idx_in, table_concat, bias_flat)

    out = out[:batch]  # drop batch padding (no-op when already aligned)
    # Free view: columns are already [feature-major, d_token-contiguous].
    return out.reshape(batch, n_features, d_token)


def init_params(cardinality_dict, d_token, key):
    """Uniform(-s, s), s = d_token**-0.5, matching _TokenInitialization('uniform').
    Tables are stored bf16 (halves HBM traffic; one-hot select stays exact)."""
    s = d_token ** -0.5
    keys = list(cardinality_dict.keys())
    cards = tuple(int(cardinality_dict[k]) for k in keys)
    offsets, _, total_rows = _table_layout(cards)
    table = jnp.zeros((total_rows, d_token), jnp.float32)
    biases = []
    for i, (k, card, off) in enumerate(zip(keys, cards, offsets)):
        k_emb, k_bias = jax.random.split(jax.random.fold_in(key, i))
        w = jax.random.uniform(k_emb, (card, d_token), jnp.float32, -s, s)
        table = table.at[off:off + card].set(w)
        biases.append(jax.random.uniform(k_bias, (d_token,), jnp.float32, -s, s))
    return keys, cards, table.astype(jnp.bfloat16), jnp.stack(biases)


if __name__ == "__main__":
    # Small, module-consistent shapes (n_features * d_token = 128 -> lane-dense output).
    cardinality_dict = {"f0": 3, "f1": 10, "f2": 7, "f3": 5}
    d_token = 32
    batch = 8

    root = jax.random.PRNGKey(0)
    keys, cards, table_bf16, biases = init_params(cardinality_dict, d_token, root)

    # Build the x_dict analogue: one int vector of shape (batch,) per feature.
    x_dict = {}
    for i, k in enumerate(keys):
        x_dict[k] = jax.random.randint(
            jax.random.fold_in(root, 1000 + i), (batch,), 0, cardinality_dict[k], jnp.int32
        )
    idx_fb = jnp.stack([x_dict[k] for k in keys], axis=0)  # (n_features, batch)

    tokens = categorical_feature_tokenizer(idx_fb, table_bf16, biases, cards)
    tokens = jax.block_until_ready(tokens)

    # Pure-JAX reference (embedding lookup on the same bf16 table + f32 bias).
    offsets, _, _ = _table_layout(cards)
    ref = jnp.stack(
        [table_bf16[offsets[i] + idx_fb[i]].astype(jnp.float32) + biases[i][None, :]
         for i in range(len(keys))],
        axis=1,
    )  # (batch, n_features, d_token)

    assert tokens.shape == (batch, len(keys), d_token), tokens.shape
    assert jnp.allclose(tokens, ref, atol=1e-5), "mismatch vs reference"
    print("KERNEL_OK")
</pallas_src>

<mosaic_0001>
module attributes {stable_mosaic.version = 11 : i64} {
  func.func @_tokenizer_kernel(%arg0: i32, %arg1: memref<4x8xi32, #tpu.memory_space<vmem>>, %arg2: memref<64x32xbf16, #tpu.memory_space<vmem>>, %arg3: memref<1x128xf32, #tpu.memory_space<vmem>>, %arg4: memref<8x128xf32, #tpu.memory_space<vmem>>) attributes {dimension_semantics = [#tpu.dimension_semantics<parallel>], iteration_bounds = array<i64: 1>, scalar_prefetch = 0 : i64, scratch_operands = 0 : i64, tpu.core_type = #tpu.core_type<tc>, window_params = [{transform_indices = @transform_0, window_bounds = array<i64: 4, 8>}, {pipeline_mode = #tpu.pipeline_mode<synchronous>, transform_indices = @transform_1, window_bounds = array<i64: 64, 32>}, {pipeline_mode = #tpu.pipeline_mode<synchronous>, transform_indices = @transform_2, window_bounds = array<i64: 1, 128>}, {transform_indices = @transform_3, window_bounds = array<i64: 8, 128>}]} {
    %c0 = arith.constant 0 : index
    %c0_0 = arith.constant 0 : index
    %0 = vector.load %arg1[%c0, %c0_0] : memref<4x8xi32, #tpu.memory_space<vmem>>, vector<1x8xi32>
    %1 = vector.shape_cast %0 : vector<1x8xi32> to vector<8xi32>
    %c0_i32 = arith.constant 0 : i32
    %c2_i32 = arith.constant 2 : i32
    %2 = vector.broadcast %c0_i32 : i32 to vector<8xi32>
    %3 = arith.maxsi %2, %1 : vector<8xi32>
    %4 = vector.broadcast %c2_i32 : i32 to vector<8xi32>
    %5 = arith.minsi %4, %3 : vector<8xi32>
    %6 = tpu.iota {dimensions = array<i32: 1>} : vector<8x16xi32>
    %7 = vector.shape_cast %5 : vector<8xi32> to vector<8x1xi32>
    %8 = vector.broadcast %7 : vector<8x1xi32> to vector<8x16xi32>
    %9 = arith.cmpi eq, %8, %6 : vector<8x16xi32>
    %10 = arith.extui %9 : vector<8x16xi1> to vector<8x16xi32>
    %11 = arith.sitofp %10 : vector<8x16xi32> to vector<8x16xf32>
    %12 = arith.truncf %11 : vector<8x16xf32> to vector<8x16xbf16>
    %c0_1 = arith.constant 0 : index
    %c0_2 = arith.constant 0 : index
    %13 = vector.load %arg2[%c0_1, %c0_2] : memref<64x32xbf16, #tpu.memory_space<vmem>>, vector<16x32xbf16>
    %cst = arith.constant dense<0.000000e+00> : vector<8x32xf32>
    %14 = tpu.matmul %12, %13, %cst {dimension_numbers = #tpu.dot_dimension_numbers<[1], [0], [0], [1], [0, 0, 1, 1], [], []>} : vector<8x16xbf16>, vector<16x32xbf16>, vector<8x32xf32> -> vector<8x32xf32>
    %c1 = arith.constant 1 : index
    %c0_3 = arith.constant 0 : index
    %15 = vector.load %arg1[%c1, %c0_3] : memref<4x8xi32, #tpu.memory_space<vmem>>, vector<1x8xi32>
    %16 = vector.shape_cast %15 : vector<1x8xi32> to vector<8xi32>
    %c0_i32_4 = arith.constant 0 : i32
    %c9_i32 = arith.constant 9 : i32
    %17 = vector.broadcast %c0_i32_4 : i32 to vector<8xi32>
    %18 = arith.maxsi %17, %16 : vector<8xi32>
    %19 = vector.broadcast %c9_i32 : i32 to vector<8xi32>
    %20 = arith.minsi %19, %18 : vector<8xi32>
    %21 = tpu.iota {dimensions = array<i32: 1>} : vector<8x16xi32>
    %22 = vector.shape_cast %20 : vector<8xi32> to vector<8x1xi32>
    %23 = vector.broadcast %22 : vector<8x1xi32> to vector<8x16xi32>
    %24 = arith.cmpi eq, %23, %21 : vector<8x16xi32>
    %25 = arith.extui %24 : vector<8x16xi1> to vector<8x16xi32>
    %26 = arith.sitofp %25 : vector<8x16xi32> to vector<8x16xf32>
    %27 = arith.truncf %26 : vector<8x16xf32> to vector<8x16xbf16>
    %c16 = arith.constant 16 : index
    %c0_5 = arith.constant 0 : index
    %28 = vector.load %arg2[%c16, %c0_5] : memref<64x32xbf16, #tpu.memory_space<vmem>>, vector<16x32xbf16>
    %cst_6 = arith.constant dense<0.000000e+00> : vector<8x32xf32>
    %29 = tpu.matmul %27, %28, %cst_6 {dimension_numbers = #tpu.dot_dimension_numbers<[1], [0], [0], [1], [0, 0, 1, 1], [], []>} : vector<8x16xbf16>, vector<16x32xbf16>, vector<8x32xf32> -> vector<8x32xf32>
    %c2 = arith.constant 2 : index
    %c0_7 = arith.constant 0 : index
    %30 = vector.load %arg1[%c2, %c0_7] : memref<4x8xi32, #tpu.memory_space<vmem>>, vector<1x8xi32>
    %31 = vector.shape_cast %30 : vector<1x8xi32> to vector<8xi32>
    %c0_i32_8 = arith.constant 0 : i32
    %c6_i32 = arith.constant 6 : i32
    %32 = vector.broadcast %c0_i32_8 : i32 to vector<8xi32>
    %33 = arith.maxsi %32, %31 : vector<8xi32>
    %34 = vector.broadcast %c6_i32 : i32 to vector<8xi32>
    %35 = arith.minsi %34, %33 : vector<8xi32>
    %36 = tpu.iota {dimensions = array<i32: 1>} : vector<8x16xi32>
    %37 = vector.shape_cast %35 : vector<8xi32> to vector<8x1xi32>
    %38 = vector.broadcast %37 : vector<8x1xi32> to vector<8x16xi32>
    %39 = arith.cmpi eq, %38, %36 : vector<8x16xi32>
    %40 = arith.extui %39 : vector<8x16xi1> to vector<8x16xi32>
    %41 = arith.sitofp %40 : vector<8x16xi32> to vector<8x16xf32>
    %42 = arith.truncf %41 : vector<8x16xf32> to vector<8x16xbf16>
    %c32 = arith.constant 32 : index
    %c0_9 = arith.constant 0 : index
    %43 = vector.load %arg2[%c32, %c0_9] : memref<64x32xbf16, #tpu.memory_space<vmem>>, vector<16x32xbf16>
    %cst_10 = arith.constant dense<0.000000e+00> : vector<8x32xf32>
    %44 = tpu.matmul %42, %43, %cst_10 {dimension_numbers = #tpu.dot_dimension_numbers<[1], [0], [0], [1], [0, 0, 1, 1], [], []>} : vector<8x16xbf16>, vector<16x32xbf16>, vector<8x32xf32> -> vector<8x32xf32>
    %c3 = arith.constant 3 : index
    %c0_11 = arith.constant 0 : index
    %45 = vector.load %arg1[%c3, %c0_11] : memref<4x8xi32, #tpu.memory_space<vmem>>, vector<1x8xi32>
    %46 = vector.shape_cast %45 : vector<1x8xi32> to vector<8xi32>
    %c0_i32_12 = arith.constant 0 : i32
    %c4_i32 = arith.constant 4 : i32
    %47 = vector.broadcast %c0_i32_12 : i32 to vector<8xi32>
    %48 = arith.maxsi %47, %46 : vector<8xi32>
    %49 = vector.broadcast %c4_i32 : i32 to vector<8xi32>
    %50 = arith.minsi %49, %48 : vector<8xi32>
    %51 = tpu.iota {dimensions = array<i32: 1>} : vector<8x16xi32>
    %52 = vector.shape_cast %50 : vector<8xi32> to vector<8x1xi32>
    %53 = vector.broadcast %52 : vector<8x1xi32> to vector<8x16xi32>
    %54 = arith.cmpi eq, %53, %51 : vector<8x16xi32>
    %55 = arith.extui %54 : vector<8x16xi1> to vector<8x16xi32>
    %56 = arith.sitofp %55 : vector<8x16xi32> to vector<8x16xf32>
    %57 = arith.truncf %56 : vector<8x16xf32> to vector<8x16xbf16>
    %c48 = arith.constant 48 : index
    %c0_13 = arith.constant 0 : index
    %58 = vector.load %arg2[%c48, %c0_13] : memref<64x32xbf16, #tpu.memory_space<vmem>>, vector<16x32xbf16>
    %cst_14 = arith.constant dense<0.000000e+00> : vector<8x32xf32>
    %59 = tpu.matmul %57, %58, %cst_14 {dimension_numbers = #tpu.dot_dimension_numbers<[1], [0], [0], [1], [0, 0, 1, 1], [], []>} : vector<8x16xbf16>, vector<16x32xbf16>, vector<8x32xf32> -> vector<8x32xf32>
    %60 = tpu.concatenate %14, %29, %44, %59 in 1 : vector<8x32xf32>, vector<8x32xf32>, vector<8x32xf32>, vector<8x32xf32> -> vector<8x128xf32>
    %c0_15 = arith.constant 0 : index
    %c0_16 = arith.constant 0 : index
    %61 = vector.load %arg3[%c0_15, %c0_16] : memref<1x128xf32, #tpu.memory_space<vmem>>, vector<1x128xf32>
    %62 = vector.broadcast %61 : vector<1x128xf32> to vector<8x128xf32>
    %63 = arith.addf %60, %62 : vector<8x128xf32>
    %c0_17 = arith.constant 0 : index
    %c0_18 = arith.constant 0 : index
    %64 = vector.load %arg4[%c0_17, %c0_18] : memref<8x128xf32, #tpu.memory_space<vmem>>, vector<8x128xf32>
    tpu.vector_store %arg4[%c0_17, %c0_18], %63 {strides = array<i32>} : memref<8x128xf32, #tpu.memory_space<vmem>>, vector<8x128xf32>,
    return
  }
  func.func @transform_0(%arg0: i32) -> (i32, i32) {
    %c0_i32 = arith.constant 0 : i32
    %c0_i32_0 = arith.constant 0 : i32
    return %c0_i32, %arg0 : i32, i32
  }
  func.func @transform_1(%arg0: i32) -> (i32, i32) {
    %c0_i32 = arith.constant 0 : i32
    %c0_i32_0 = arith.constant 0 : i32
    %c0_i32_1 = arith.constant 0 : i32
    return %c0_i32, %c0_i32_0 : i32, i32
  }
  func.func @transform_2(%arg0: i32) -> (i32, i32) {
    %c0_i32 = arith.constant 0 : i32
    %c0_i32_0 = arith.constant 0 : i32
    %c0_i32_1 = arith.constant 0 : i32
    return %c0_i32, %c0_i32_0 : i32, i32
  }
  func.func @transform_3(%arg0: i32) -> (i32, i32) {
    %c0_i32 = arith.constant 0 : i32
    %c0_i32_0 = arith.constant 0 : i32
    return %arg0, %c0_i32 : i32, i32
  }
}

</mosaic_0001>

<llo_original>
// kernel: tpu_custom_call.1
$region0: #{tpu_custom_call.1}
  #allocation0 [shape = 'u32[]', space=smem, size = 0x4, offset = 0x4, fixed_abs, tag = 'smem constant byte address 0x4 - core index']
  #allocation1 [shape = 'u32[144,128]{1,0:T(1,128)}', space=vmem, size = 0x12000, scoped, tag = 'internal scratch']
  %s0 = inlined_call_operand.vmem [shape: s32[4,8], index: 0, kind: input, shape index: {}]
  %s1 = inlined_call_operand.vmem [shape: bf16[64,32], index: 1, kind: input, shape index: {}]
  %s2 = inlined_call_operand.vmem [shape: f32[1,128], index: 2, kind: input, shape index: {}]
  %s3 = inlined_call_operand.hbm [shape: f32[8,128], index: 3, kind: output, shape index: {}]
  %s4 = sld [smem:[#allocation0]]
  $region22: #{tpu_custom_call.1} parent=0
    _
  %s6 = ssub.s32 1, %s4
  %s7 = scalar_select 0, %s6, %s4
  $region1: #{tpu_custom_call.1} parent=0
    #allocation2 [shape = 'u8[4096]{0}', space=vmem, size = 0x1000, scoped, tag = 'output window, operand 0, single buffered']
    #allocation3 [shape = 's32[1]{0}', space=sflag, size = 0x4, scoped, tag = 'scoped memory for tpu_custom_call.1']
    %8 = vsyncpa [#allocation3], 0
    // Predicated region
    $region2: #{tpu_custom_call.1} parent=1 // pred_check
      _
    $region3: #{tpu_custom_call.1} parent=1 // pred_check_branch
      %10 = sbr.rel (0) target = $region5
    $region4: #{tpu_custom_call.1} parent=1 // pred_region
      _
    $region5: #{tpu_custom_call.1} parent=1 // pred_fallthru
      _
    // Predicated region
    $region6: #{tpu_custom_call.1} parent=1 // pred_check
      _
    $region7: #{tpu_custom_call.1} parent=1 // pred_check_branch
      %12 = sbr.rel (0) target = $region9
    $region8: #{tpu_custom_call.1} parent=1 // pred_region
      _
    $region9: #{tpu_custom_call.1} parent=1 // pred_fallthru
      _
    // Predicated region
    $region10: #{tpu_custom_call.1} parent=1 // pred_check
      _
    $region11: #{tpu_custom_call.1} parent=1 // pred_check_branch
      %14 = sbr.rel (0) target = $region13
    $region12: #{tpu_custom_call.1} parent=1 // pred_region
      _
    $region13: #{tpu_custom_call.1} parent=1 // pred_fallthru
      _
    %v16 = vld [vmem:[%s0] sm:$0x1]
    %vm17 = vcmp.gt.s32.totalorder %v16, 0
    %v18 = vsel %vm17, %v16, 0
    %vm19 = vcmp.lt.s32.totalorder %v18, 2
    %v20 = vsel %vm19, %v18, 2
    %v21 = vlaneseq
    %v22 = vand.u32 %v21, 127
    %v23 = vlaneseq
    %v24 = vshrl.u32 %v23, 7
    %v25 = vsub.s32 0, %v24
    %v26 = vrot.slane %v20, %v25
    %28 = vbcast.lane.b32.xlu0 %v26, 256
    %v29 = vpop.permute.xlu0 %28
    %vm30 = vcmp.eq.s32.totalorder %v29, %v22
    %v31 = vsel %vm30, 1, 0
    %v32 = vcvt.s32.f32 %v31
    %v33 = vpack.c.bf16 %v32, %v32
    %v34 = vld [vmem:[%s1] sm:$0xf]
    %v35 = vld [vmem:[%s1 + $0x4] sm:$0xf]
    %v38 = vunpack.c.l.b16 %v34
    %v39 = vunpack.c.l.b16 %v35
    %v40 = vpack.c.b16 %v39, %v38
    %vm42 = vcmask 130048
    %v44 = vsel %vm42, %v33, 0
    %46 = vmatprep.subr.bf16.mxu0 0
    %47 = vmatpush1.bf16.msra.mxu0 0
    %48 = vmatprep.subr.bf16.mxu0 0
    %49 = vmatpush1.bf16.msra.mxu0 0
    %50 = vmatprep.subr.bf16.mxu0 0
    %51 = vmatpush1.bf16.msra.mxu0 0
    %52 = vmatprep.subr.bf16.mxu0 0
    %53 = vmatpush1.bf16.msra.mxu0 0
    %54 = vmatprep.subr.bf16.mxu0 0
    %55 = vmatpush1.bf16.msra.mxu0 0
    %56 = vmatprep.subr.bf16.mxu0 0
    %57 = vmatpush1.bf16.msra.mxu0 0
    %58 = vmatprep.subr.bf16.mxu0 0
    %59 = vmatpush1.bf16.msra.mxu0 0
    %60 = vmatprep.subr.bf16.mxu0 0
    %61 = vmatpush1.bf16.msra.mxu0 %v40
    %62 = vmatprep.subr.bf16.mxu0 0
    %63 = vmatpush2.bf16.msra.mxu0 0
    %64 = vmatprep.subr.bf16.mxu0 0
    %65 = vmatpush2.bf16.msra.mxu0 0
    %66 = vmatprep.subr.bf16.mxu0 0
    %67 = vmatpush2.bf16.msra.mxu0 0
    %68 = vmatprep.subr.bf16.mxu0 0
    %69 = vmatpush2.bf16.msra.mxu0 0
    %70 = vmatprep.subr.bf16.mxu0 0
    %71 = vmatpush2.bf16.msra.mxu0 0
    %72 = vmatprep.subr.bf16.mxu0 0
    %73 = vmatpush2.bf16.msra.mxu0 0
    %74 = vmatprep.subr.bf16.mxu0 0
    %75 = vmatpush2.bf16.msra.mxu0 0
    %76 = vmatprep.subr.bf16.mxu0 0
    %77 = vmatpush2.bf16.msra.mxu0 0
    %78 = vmatprep.mubr.bf16.mxu0 0
    %79 = vmatmul.mubr.bf16.gmra.mxu0 %v44
    %v80 = vpop.f32.mrf.mxu0
    %v81 = vadd.f32 0.0, %v80
    %v82 = vpop.f32.mrf.mxu0
    %v83 = vpop.f32.mrf.mxu0
    %v84 = vpop.f32.mrf.mxu0
    %85 = vdwg.mxu0
    %v86 = vld [vmem:[%s0 + $0x1] sm:$0x1]
    %vm87 = vcmp.gt.s32.totalorder %v86, 0
    %v88 = vsel %vm87, %v86, 0
    %vm89 = vcmp.lt.s32.totalorder %v88, 9
    %v90 = vsel %vm89, %v88, 9
    %v91 = vlaneseq
    %v92 = vshrl.u32 %v91, 7
    %v93 = vsub.s32 0, %v92
    %v94 = vrot.slane %v90, %v93
    %96 = vbcast.lane.b32.xlu0 %v94, 256
    %v97 = vpop.permute.xlu0 %96
    %vm98 = vcmp.eq.s32.totalorder %v97, %v22
    %v99 = vsel %vm98, 1, 0
    %v100 = vcvt.s32.f32 %v99
    %v101 = vpack.c.bf16 %v100, %v100
    %v102 = vld [vmem:[%s1 + $0x8] sm:$0xf]
    %v103 = vld [vmem:[%s1 + $0xc] sm:$0xf]
    %v106 = vunpack.c.l.b16 %v102
    %v107 = vunpack.c.l.b16 %v103
    %v108 = vpack.c.b16 %v107, %v106
    %v111 = vsel %vm42, %v101, 0
    %113 = vmatprep.subr.bf16.mxu0 0
    %114 = vmatpush1.bf16.msra.mxu0 0
    %115 = vmatprep.subr.bf16.mxu0 0
    %116 = vmatpush1.bf16.msra.mxu0 0
    %117 = vmatprep.subr.bf16.mxu0 0
    %118 = vmatpush1.bf16.msra.mxu0 0
    %119 = vmatprep.subr.bf16.mxu0 0
    %120 = vmatpush1.bf16.msra.mxu0 0
    %121 = vmatprep.subr.bf16.mxu0 0
    %122 = vmatpush1.bf16.msra.mxu0 0
    %123 = vmatprep.subr.bf16.mxu0 0
    %124 = vmatpush1.bf16.msra.mxu0 0
    %125 = vmatprep.subr.bf16.mxu0 0
    %126 = vmatpush1.bf16.msra.mxu0 0
    %127 = vmatprep.subr.bf16.mxu0 0
    %128 = vmatpush1.bf16.msra.mxu0 %v108
    %129 = vmatprep.subr.bf16.mxu0 0
    %130 = vmatpush2.bf16.msra.mxu0 0
    %131 = vmatprep.subr.bf16.mxu0 0
    %132 = vmatpush2.bf16.msra.mxu0 0
    %133 = vmatprep.subr.bf16.mxu0 0
    %134 = vmatpush2.bf16.msra.mxu0 0
    %135 = vmatprep.subr.bf16.mxu0 0
    %136 = vmatpush2.bf16.msra.mxu0 0
    %137 = vmatprep.subr.bf16.mxu0 0
    %138 = vmatpush2.bf16.msra.mxu0 0
    %139 = vmatprep.subr.bf16.mxu0 0
    %140 = vmatpush2.bf16.msra.mxu0 0
    %141 = vmatprep.subr.bf16.mxu0 0
    %142 = vmatpush2.bf16.msra.mxu0 0
    %143 = vmatprep.subr.bf16.mxu0 0
    %144 = vmatpush2.bf16.msra.mxu0 0
    %145 = vmatprep.mubr.bf16.mxu0 0
    %146 = vmatmul.mubr.bf16.gmra.mxu0 %v111
    %v147 = vpop.f32.mrf.mxu0
    %v148 = vadd.f32 0.0, %v147
    %v149 = vpop.f32.mrf.mxu0
    %v150 = vpop.f32.mrf.mxu0
    %v151 = vpop.f32.mrf.mxu0
    %152 = vdwg.mxu0
    %v153 = vld [vmem:[%s0 + $0x2] sm:$0x1]
    %vm154 = vcmp.gt.s32.totalorder %v153, 0
    %v155 = vsel %vm154, %v153, 0
    %vm156 = vcmp.lt.s32.totalorder %v155, 6
    %v157 = vsel %vm156, %v155, 6
    %v158 = vlaneseq
    %v159 = vshrl.u32 %v158, 7
    %v160 = vsub.s32 0, %v159
    %v161 = vrot.slane %v157, %v160
    %163 = vbcast.lane.b32.xlu0 %v161, 256
    %v164 = vpop.permute.xlu0 %163
    %vm165 = vcmp.eq.s32.totalorder %v164, %v22
    %v166 = vsel %vm165, 1, 0
    %v167 = vcvt.s32.f32 %v166
    %v168 = vpack.c.bf16 %v167, %v167
    %v169 = vld [vmem:[%s1 + $0x10] sm:$0xf]
    %v170 = vld [vmem:[%s1 + $0x14] sm:$0xf]
    %v173 = vunpack.c.l.b16 %v169
    %v174 = vunpack.c.l.b16 %v170
    %v175 = vpack.c.b16 %v174, %v173
    %v178 = vsel %vm42, %v168, 0
    %180 = vmatprep.subr.bf16.mxu0 0
    %181 = vmatpush1.bf16.msra.mxu0 0
    %182 = vmatprep.subr.bf16.mxu0 0
    %183 = vmatpush1.bf16.msra.mxu0 0
    %184 = vmatprep.subr.bf16.mxu0 0
    %185 = vmatpush1.bf16.msra.mxu0 0
    %186 = vmatprep.subr.bf16.mxu0 0
    %187 = vmatpush1.bf16.msra.mxu0 0
    %188 = vmatprep.subr.bf16.mxu0 0
    %189 = vmatpush1.bf16.msra.mxu0 0
    %190 = vmatprep.subr.bf16.mxu0 0
    %191 = vmatpush1.bf16.msra.mxu0 0
    %192 = vmatprep.subr.bf16.mxu0 0
    %193 = vmatpush1.bf16.msra.mxu0 0
    %194 = vmatprep.subr.bf16.mxu0 0
    %195 = vmatpush1.bf16.msra.mxu0 %v175
    %196 = vmatprep.subr.bf16.mxu0 0
    %197 = vmatpush2.bf16.msra.mxu0 0
    %198 = vmatprep.subr.bf16.mxu0 0
    %199 = vmatpush2.bf16.msra.mxu0 0
    %200 = vmatprep.subr.bf16.mxu0 0
    %201 = vmatpush2.bf16.msra.mxu0 0
    %202 = vmatprep.subr.bf16.mxu0 0
    %203 = vmatpush2.bf16.msra.mxu0 0
    %204 = vmatprep.subr.bf16.mxu0 0
    %205 = vmatpush2.bf16.msra.mxu0 0
    %206 = vmatprep.subr.bf16.mxu0 0
    %207 = vmatpush2.bf16.msra.mxu0 0
    %208 = vmatprep.subr.bf16.mxu0 0
    %209 = vmatpush2.bf16.msra.mxu0 0
    %210 = vmatprep.subr.bf16.mxu0 0
    %211 = vmatpush2.bf16.msra.mxu0 0
    %212 = vmatprep.mubr.bf16.mxu0 0
    %213 = vmatmul.mubr.bf16.gmra.mxu0 %v178
    %v214 = vpop.f32.mrf.mxu0
    %v215 = vadd.f32 0.0, %v214
    %v216 = vpop.f32.mrf.mxu0
    %v217 = vpop.f32.mrf.mxu0
    %v218 = vpop.f32.mrf.mxu0
    %219 = vdwg.mxu0
    %v220 = vld [vmem:[%s0 + $0x3] sm:$0x1]
    %vm221 = vcmp.gt.s32.totalorder %v220, 0
    %v222 = vsel %vm221, %v220, 0
    %vm223 = vcmp.lt.s32.totalorder %v222, 4
    %v224 = vsel %vm223, %v222, 4
    %v225 = vlaneseq
    %v226 = vshrl.u32 %v225, 7
    %v227 = vsub.s32 0, %v226
    %v228 = vrot.slane %v224, %v227
    %230 = vbcast.lane.b32.xlu0 %v228, 256
    %v231 = vpop.permute.xlu0 %230
    %vm232 = vcmp.eq.s32.totalorder %v231, %v22
    %v233 = vsel %vm232, 1, 0
    %v234 = vcvt.s32.f32 %v233
    %v235 = vpack.c.bf16 %v234, %v234
    %v236 = vld [vmem:[%s1 + $0x18] sm:$0xf]
    %v237 = vld [vmem:[%s1 + $0x1c] sm:$0xf]
    %v240 = vunpack.c.l.b16 %v236
    %v241 = vunpack.c.l.b16 %v237
    %v242 = vpack.c.b16 %v241, %v240
    %v245 = vsel %vm42, %v235, 0
    %247 = vmatprep.subr.bf16.mxu0 0
    %248 = vmatpush1.bf16.msra.mxu0 0
    %249 = vmatprep.subr.bf16.mxu0 0
    %250 = vmatpush1.bf16.msra.mxu0 0
    %251 = vmatprep.subr.bf16.mxu0 0
    %252 = vmatpush1.bf16.msra.mxu0 0
    %253 = vmatprep.subr.bf16.mxu0 0
    %254 = vmatpush1.bf16.msra.mxu0 0
    %255 = vmatprep.subr.bf16.mxu0 0
    %256 = vmatpush1.bf16.msra.mxu0 0
    %257 = vmatprep.subr.bf16.mxu0 0
    %258 = vmatpush1.bf16.msra.mxu0 0
    %259 = vmatprep.subr.bf16.mxu0 0
    %260 = vmatpush1.bf16.msra.mxu0 0
    %261 = vmatprep.subr.bf16.mxu0 0
    %262 = vmatpush1.bf16.msra.mxu0 %v242
    %263 = vmatprep.subr.bf16.mxu0 0
    %264 = vmatpush2.bf16.msra.mxu0 0
    %265 = vmatprep.subr.bf16.mxu0 0
    %266 = vmatpush2.bf16.msra.mxu0 0
    %267 = vmatprep.subr.bf16.mxu0 0
    %268 = vmatpush2.bf16.msra.mxu0 0
    %269 = vmatprep.subr.bf16.mxu0 0
    %270 = vmatpush2.bf16.msra.mxu0 0
    %271 = vmatprep.subr.bf16.mxu0 0
    %272 = vmatpush2.bf16.msra.mxu0 0
    %273 = vmatprep.subr.bf16.mxu0 0
    %274 = vmatpush2.bf16.msra.mxu0 0
    %275 = vmatprep.subr.bf16.mxu0 0
    %276 = vmatpush2.bf16.msra.mxu0 0
    %277 = vmatprep.subr.bf16.mxu0 0
    %278 = vmatpush2.bf16.msra.mxu0 0
    %279 = vmatprep.mubr.bf16.mxu0 0
    %280 = vmatmul.mubr.bf16.gmra.mxu0 %v245
    %v281 = vpop.f32.mrf.mxu0
    %v282 = vadd.f32 0.0, %v281
    %v283 = vpop.f32.mrf.mxu0
    %v284 = vpop.f32.mrf.mxu0
    %v285 = vpop.f32.mrf.mxu0
    %286 = vdwg.mxu0
    %288 = vrot.lane.b32.xlu0 %v148, 32
    %v289 = vpop.permute.xlu0 %288
    %292 = vrot.lane.b32.xlu0 %v215, 64
    %v293 = vpop.permute.xlu0 %292
    %296 = vrot.lane.b32.xlu0 %v282, 96
    %v297 = vpop.permute.xlu0 %296
    %vm299 = vcmask 261120
    %v300 = vsel %vm299, %v81, %v289
    %vm301 = vcmask 523264
    %v302 = vsel %vm301, %v300, %v293
    %vm303 = vcmask 785408
    %v304 = vsel %vm303, %v302, %v297
    %v305 = vld [vmem:[%s2] sm:$0x1]
    %v307 = vlaneseq
    %v308 = vshrl.u32 %v307, 7
    %v309 = vsub.s32 0, %v308
    %v310 = vrot.slane %v305, %v309
    %v312 = vadd.f32 %v304, %v310
    %313 = vst [vmem:[#allocation2] sm:$0xff] %v312
    // Predicated region
    $region14: #{tpu_custom_call.1} parent=1 // pred_check
      _
    $region15: #{tpu_custom_call.1} parent=1 // pred_check_branch
      %315 = sbr.rel (0) target = $region17
    $region16: #{tpu_custom_call.1} parent=1 // pred_region
      %s317 = ssub.s32 128, 128
      %318 = vsyncadd [#allocation3], %s317
      %s320 = sshll.u32 [#allocation2], 4
      %s321 = int_to_ptr.vmem [resolvable:$true] %s320
      %323 = dma.vmem_to_hbm [thread:$0]  %s321, 128, %s3, [#allocation3]
    $region17: #{tpu_custom_call.1} parent=1 // pred_fallthru
      _
    // Predicated region
    $region18: #{tpu_custom_call.1} parent=1 // pred_check
      _
    $region19: #{tpu_custom_call.1} parent=1 // pred_check_branch
      %325 = sbr.rel (0) target = $region21
    $region20: #{tpu_custom_call.1} parent=1 // pred_region
      %326 = dma.done [#allocation3], 128
    $region21: #{tpu_custom_call.1} parent=1 // pred_fallthru
      _
    %327 = vsyncpa [#allocation3], 1

</llo_original>
